<compile_context>
chip_gen: v6e
topology: v6e:2x2x1
jax: 0.10.0
libtpu: 0.0.40
codegen_flags: <defaults>
</compile_context>

<pallas_src>
import jax
import jax.numpy as jnp
import numpy as np
from jax.experimental import pallas as pl
from jax.experimental.pallas import tpu as pltpu


# ----------------------------------------------------------------------------
# Kernel
# ----------------------------------------------------------------------------
def _node_attention_pool_kernel(x_ref, kq_ref, vt_ref, bias_ref, o_ref):
    """Fused node-attention pooling on a channel-major (C, TP) tile.

    x_ref   : (C, TP)  tile of x, positions on the 128-lane axis
    kq_ref  : (N, C)   key embedding with query-BN scale and alpha_bn scale folded in
    vt_ref  : (C, N)   value embedding, transposed
    bias_ref: (C, 1)   all position-independent offsets folded through value^T
    o_ref   : (C, TP)  output tile
    """
    x = x_ref[...].astype(jnp.float32)
    # __tensor_product_1 (+ folded BatchNorm3d(x) scale + folded alpha_bn scale): (N, TP)
    alpha = jnp.dot(kq_ref[...], x, preferred_element_type=jnp.float32)
    # __tensor_product_2 (+ every constant offset folded into `bias`): (C, TP)
    y = jnp.dot(vt_ref[...], alpha, preferred_element_type=jnp.float32) + bias_ref[...]
    o_ref[...] = y.astype(o_ref.dtype)


# ----------------------------------------------------------------------------
# Parameter-only node embeddings (glue; tiny (N, C) math shared by kernel & ref)
# ----------------------------------------------------------------------------
def _node_embeddings(nodes, p, eps=1e-5):
    # key_embedding = BatchNorm1d(C) -> Linear(C, C) -> LayerNorm(C), applied to nodes (N, C)
    s_k = p["kbn_gamma"] * jax.lax.rsqrt(p["kbn_var"] + eps)
    k = nodes * s_k[None, :] + (p["kbn_beta"] - p["kbn_mean"] * s_k)[None, :]
    k = k @ p["k_w"].T + p["k_b"]
    mu = jnp.mean(k, axis=-1, keepdims=True)
    var = jnp.mean((k - mu) ** 2, axis=-1, keepdims=True)        # biased var (PyTorch LN)
    k = (k - mu) * jax.lax.rsqrt(var + eps) * p["ln_gamma"] + p["ln_beta"]
    # value_embedding = BatchNorm1d(C)
    s_v = p["vbn_gamma"] * jax.lax.rsqrt(p["vbn_var"] + eps)
    v = nodes * s_v[None, :] + (p["vbn_beta"] - p["vbn_mean"] * s_v)[None, :]
    return k, v


# ----------------------------------------------------------------------------
# Wrapper
# ----------------------------------------------------------------------------
def node_attention_pool(x, nodes, params, *, tile_p=1024, eps=1e-5):
    """x: (B, C, T, H, W), nodes: (N, C). Returns y: (B, C, T, H, W)."""
    B, C, T, H, W = x.shape
    N, Cn = nodes.shape
    assert Cn == C, f"node_dim {Cn} must equal n_channels {C}"

    key_emb, value_emb = _node_embeddings(nodes, params, eps)    # (N, C), (N, C)

    # query_embedding = BatchNorm3d(C) in eval mode -> per-channel affine on x
    s_q = params["q_gamma"] * jax.lax.rsqrt(params["q_var"] + eps)       # (C,)
    b_q = params["q_beta"] - params["q_mean"] * s_q                      # (C,)
    # alpha_bn = BatchNorm3d(n_nodes, dim=3) in eval mode -> per-node affine
    s_a = params["a_gamma"] * jax.lax.rsqrt(params["a_var"] + eps)       # (N,)
    b_a = params["a_beta"] - params["a_mean"] * s_a                      # (N,)

    # Fold every position-independent affine into the tensor-product operands:
    #   alpha = alpha_bn(key @ (s_q*x + b_q)) = kq @ x + const_per_node
    #   y     = value^T @ alpha              = vT @ (kq @ x) + bias
    kq = (s_a[:, None] * key_emb * s_q[None, :]).astype(jnp.float32)     # (N, C)
    vT = jnp.transpose(value_emb).astype(jnp.float32)                    # (C, N)
    bias = (vT @ (s_a * (key_emb @ b_q) + b_a)).reshape(C, 1).astype(jnp.float32)  # (C, 1)

    # Channel-major layout: (B, C, T*H*W) is a free reshape (no HBM transpose);
    # positions live on the 128-lane axis for lane-dense DMA and stores.
    P = T * H * W
    x3 = x.reshape(B, C, P)

    # Tile the position axis: full extent if small, otherwise a multiple of 128 lanes.
    tp = P if P <= tile_p else max(128, (tile_p // 128) * 128)
    grid = (B, pl.cdiv(P, tp))   # boundary tiles are safe: output columns are independent

    out3 = pl.pallas_call(
        _node_attention_pool_kernel,
        out_shape=jax.ShapeDtypeStruct((B, C, P), x.dtype),
        grid=grid,
        in_specs=[
            pl.BlockSpec((None, C, tp), lambda b, i: (b, 0, i)),     # x tile -> (C, tp)
            pl.BlockSpec(memory_space=pltpu.MemorySpace.VMEM),       # kq   (resident, un-pipelined)
            pl.BlockSpec(memory_space=pltpu.MemorySpace.VMEM),       # vT
            pl.BlockSpec(memory_space=pltpu.MemorySpace.VMEM),       # bias
        ],
        out_specs=pl.BlockSpec((None, C, tp), lambda b, i: (b, 0, i)),
        compiler_params=pltpu.CompilerParams(
            dimension_semantics=("parallel", "parallel")),
    )(x3, kq, vT, bias)

    return out3.reshape(B, C, T, H, W)


# ----------------------------------------------------------------------------
# Pure-JAX reference mirroring the PyTorch forward (eval mode), unfused
# ----------------------------------------------------------------------------
def node_attention_pool_reference(x, nodes, params, eps=1e-5):
    key_emb, value_emb = _node_embeddings(nodes, params, eps)
    s_q = params["q_gamma"] * jax.lax.rsqrt(params["q_var"] + eps)
    b_q = params["q_beta"] - params["q_mean"] * s_q
    query = x * s_q[None, :, None, None, None] + b_q[None, :, None, None, None]
    # __tensor_product_1: (B,T,H,W,N) -> permute -> (B,H,W,N,T)
    alpha = jnp.einsum("bcthw,nc->bthwn", query, key_emb)
    alpha = jnp.transpose(alpha, (0, 2, 3, 4, 1))
    # alpha_bn: BatchNorm over node dim (dim=3), eval mode
    s_a = params["a_gamma"] * jax.lax.rsqrt(params["a_var"] + eps)
    b_a = params["a_beta"] - params["a_mean"] * s_a
    alpha = alpha * s_a[None, None, None, :, None] + b_a[None, None, None, :, None]
    # __tensor_product_2: -> (B, C, T, H, W)
    y = jnp.einsum("bhwnt,nc->bcthw", alpha, value_emb)
    return y


# ----------------------------------------------------------------------------
# Deterministic parameters (eval-mode BN running stats + affine, Linear, LayerNorm)
# ----------------------------------------------------------------------------
def make_params(key, C, N):
    ks = jax.random.split(key, 20)
    u = lambda k, n, lo, hi: jax.random.uniform(k, (n,), jnp.float32, lo, hi)
    nrm = lambda k, n, s: s * jax.random.normal(k, (n,), jnp.float32)
    bound = 1.0 / np.sqrt(C)
    return {
        # query_embedding = nn.BatchNorm3d(C)
        "q_gamma": u(ks[0], C, 0.5, 1.5), "q_beta": nrm(ks[1], C, 0.1),
        "q_mean":  nrm(ks[2], C, 0.1),    "q_var":  u(ks[3], C, 0.5, 1.5),
        # key_embedding = BN1d(C) -> Linear(C, C) -> LayerNorm(C)
        "kbn_gamma": u(ks[4], C, 0.5, 1.5), "kbn_beta": nrm(ks[5], C, 0.1),
        "kbn_mean":  nrm(ks[6], C, 0.1),    "kbn_var":  u(ks[7], C, 0.5, 1.5),
        "k_w": jax.random.uniform(ks[8], (C, C), jnp.float32, -bound, bound),
        "k_b": jax.random.uniform(ks[9], (C,), jnp.float32, -bound, bound),
        "ln_gamma": u(ks[10], C, 0.5, 1.5), "ln_beta": nrm(ks[11], C, 0.1),
        # value_embedding = nn.BatchNorm1d(C)
        "vbn_gamma": u(ks[12], C, 0.5, 1.5), "vbn_beta": nrm(ks[13], C, 0.1),
        "vbn_mean":  nrm(ks[14], C, 0.1),    "vbn_var":  u(ks[15], C, 0.5, 1.5),
        # alpha_bn = BatchNorm3d(n_nodes, dim=3)
        "a_gamma": u(ks[16], N, 0.5, 1.5), "a_beta": nrm(ks[17], N, 0.1),
        "a_mean":  nrm(ks[18], N, 0.1),    "a_var":  u(ks[19], N, 0.5, 1.5),
    }


if __name__ == "__main__":
    B, C, T, H, W = 2, 8, 8, 16, 16     # x: (B, n_channels, T, H, W);  P per batch = 2048
    N_NODES = 16                         # nodes: (n_nodes, n_channels)

    root = jax.random.PRNGKey(0)
    kx, kn, kp = jax.random.split(root, 3)
    x = jax.random.normal(kx, (B, C, T, H, W), jnp.float32)
    nodes = jax.random.normal(kn, (N_NODES, C), jnp.float32)
    params = make_params(kp, C, N_NODES)

    out = jax.block_until_ready(node_attention_pool(x, nodes, params))
    ref = node_attention_pool_reference(x, nodes, params)
    np.testing.assert_allclose(np.asarray(out), np.asarray(ref), rtol=1e-4, atol=1e-4)

    print("KERNEL_OK")
</pallas_src>

<mosaic_0001>
module attributes {stable_mosaic.version = 11 : i64} {
  func.func @_node_attention_pool_kernel(%arg0: i32, %arg1: i32, %arg2: memref<1x8x1024xf32, #tpu.memory_space<vmem>>, %arg3: memref<16x8xf32, #tpu.memory_space<vmem>>, %arg4: memref<8x16xf32, #tpu.memory_space<vmem>>, %arg5: memref<8x1xf32, #tpu.memory_space<vmem>>, %arg6: memref<1x8x1024xf32, #tpu.memory_space<vmem>>) attributes {dimension_semantics = [#tpu.dimension_semantics<parallel>, #tpu.dimension_semantics<parallel>], iteration_bounds = array<i64: 2, 2>, scalar_prefetch = 0 : i64, scratch_operands = 0 : i64, tpu.core_type = #tpu.core_type<tc>, window_params = [{transform_indices = @transform_0, window_bounds = array<i64: 1, 8, 1024>}, {pipeline_mode = #tpu.pipeline_mode<synchronous>, transform_indices = @transform_1, window_bounds = array<i64: 16, 8>}, {pipeline_mode = #tpu.pipeline_mode<synchronous>, transform_indices = @transform_2, window_bounds = array<i64: 8, 16>}, {pipeline_mode = #tpu.pipeline_mode<synchronous>, transform_indices = @transform_3, window_bounds = array<i64: 8, 1>}, {transform_indices = @transform_4, window_bounds = array<i64: 1, 8, 1024>}]} {
    %c0 = arith.constant 0 : index
    %c0_0 = arith.constant 0 : index
    %c0_1 = arith.constant 0 : index
    %0 = vector.load %arg2[%c0, %c0_0, %c0_1] : memref<1x8x1024xf32, #tpu.memory_space<vmem>>, vector<1x8x1024xf32>
    %1 = vector.shape_cast %0 : vector<1x8x1024xf32> to vector<8x1024xf32>
    %c0_2 = arith.constant 0 : index
    %c0_3 = arith.constant 0 : index
    %2 = vector.load %arg3[%c0_2, %c0_3] : memref<16x8xf32, #tpu.memory_space<vmem>>, vector<16x8xf32>
    %cst = arith.constant dense<0.000000e+00> : vector<16x1024xf32>
    %3 = tpu.matmul %2, %1, %cst {dimension_numbers = #tpu.dot_dimension_numbers<[1], [0], [0], [1], [0, 0, 1, 1], [], []>} : vector<16x8xf32>, vector<8x1024xf32>, vector<16x1024xf32> -> vector<16x1024xf32>
    %c0_4 = arith.constant 0 : index
    %c0_5 = arith.constant 0 : index
    %4 = vector.load %arg4[%c0_4, %c0_5] : memref<8x16xf32, #tpu.memory_space<vmem>>, vector<8x16xf32>
    %cst_6 = arith.constant dense<0.000000e+00> : vector<8x1024xf32>
    %5 = tpu.matmul %4, %3, %cst_6 {dimension_numbers = #tpu.dot_dimension_numbers<[1], [0], [0], [1], [0, 0, 1, 1], [], []>} : vector<8x16xf32>, vector<16x1024xf32>, vector<8x1024xf32> -> vector<8x1024xf32>
    %c0_7 = arith.constant 0 : index
    %c0_8 = arith.constant 0 : index
    %6 = vector.load %arg5[%c0_7, %c0_8] : memref<8x1xf32, #tpu.memory_space<vmem>>, vector<8x1xf32>
    %7 = vector.broadcast %6 : vector<8x1xf32> to vector<8x1024xf32>
    %8 = arith.addf %5, %7 : vector<8x1024xf32>
    %c0_9 = arith.constant 0 : index
    %c0_10 = arith.constant 0 : index
    %c0_11 = arith.constant 0 : index
    %9 = vector.load %arg6[%c0_9, %c0_10, %c0_11] : memref<1x8x1024xf32, #tpu.memory_space<vmem>>, vector<1x8x1024xf32>
    %10 = vector.shape_cast %9 : vector<1x8x1024xf32> to vector<8x1024xf32>
    %11 = vector.shape_cast %8 : vector<8x1024xf32> to vector<1x8x1024xf32>
    tpu.vector_store %arg6[%c0_9, %c0_10, %c0_11], %11 {strides = array<i32>} : memref<1x8x1024xf32, #tpu.memory_space<vmem>>, vector<1x8x1024xf32>,
    return
  }
  func.func @transform_0(%arg0: i32, %arg1: i32) -> (i32, i32, i32) {
    %c0_i32 = arith.constant 0 : i32
    %c0_i32_0 = arith.constant 0 : i32
    return %arg0, %c0_i32, %arg1 : i32, i32, i32
  }
  func.func @transform_1(%arg0: i32, %arg1: i32) -> (i32, i32) {
    %c0_i32 = arith.constant 0 : i32
    %c0_i32_0 = arith.constant 0 : i32
    %c0_i32_1 = arith.constant 0 : i32
    return %c0_i32, %c0_i32_0 : i32, i32
  }
  func.func @transform_2(%arg0: i32, %arg1: i32) -> (i32, i32) {
    %c0_i32 = arith.constant 0 : i32
    %c0_i32_0 = arith.constant 0 : i32
    %c0_i32_1 = arith.constant 0 : i32
    return %c0_i32, %c0_i32_0 : i32, i32
  }
  func.func @transform_3(%arg0: i32, %arg1: i32) -> (i32, i32) {
    %c0_i32 = arith.constant 0 : i32
    %c0_i32_0 = arith.constant 0 : i32
    %c0_i32_1 = arith.constant 0 : i32
    return %c0_i32, %c0_i32_0 : i32, i32
  }
  func.func @transform_4(%arg0: i32, %arg1: i32) -> (i32, i32, i32) {
    %c0_i32 = arith.constant 0 : i32
    %c0_i32_0 = arith.constant 0 : i32
    return %arg0, %c0_i32, %arg1 : i32, i32, i32
  }
}

</mosaic_0001>

<llo_original>
// kernel: tpu_custom_call.1
$region0: #{tpu_custom_call.1}
  #allocation0 [shape = 'u32[]', space=smem, size = 0x4, offset = 0x4, fixed_abs, tag = 'smem constant byte address 0x4 - core index']
  #allocation1 [shape = 'u32[144,128]{1,0:T(1,128)}', space=vmem, size = 0x12000, scoped, tag = 'internal scratch']
  %s0 = inlined_call_operand.hbm [shape: f32[2,8,2048], index: 0, kind: input, shape index: {}]
  %s1 = inlined_call_operand.vmem [shape: f32[16,8], index: 1, kind: input, shape index: {}]
  %s2 = inlined_call_operand.vmem [shape: f32[8,16], index: 2, kind: input, shape index: {}]
  %s3 = inlined_call_operand.vmem [shape: f32[8,1], index: 3, kind: input, shape index: {}]
  %s4 = inlined_call_operand.hbm [shape: f32[2,8,2048], index: 4, kind: output, shape index: {}]
  %s5 = sld [smem:[#allocation0]]
  $region53: #{tpu_custom_call.1} parent=0
    _
  %s7 = ssub.s32 1, %s5
  %s8 = scalar_select 0, %s7, %s5
  $region1: #{tpu_custom_call.1} parent=0
    #allocation2 [shape = 'u8[65536]{0}', space=vmem, size = 0x10000, scoped, tag = 'input window, operand 0']
    #allocation3 [shape = 's32[2]{0}', space=sflag, size = 0x8, scoped, tag = 'scoped memory for tpu_custom_call.1']
    #allocation4 [shape = 's32[2]{0}', space=sflag, size = 0x8, scoped, tag = 'scoped memory for tpu_custom_call.1']
    #allocation5 [shape = 'u8[65536]{0}', space=vmem, size = 0x10000, scoped, tag = 'output window, operand 0']
    %9 = vsyncpa [#allocation3], 0
    %s10 = scalar_lea.sflag [#allocation3], 1
    %11 = vsyncpa %s10, 0
    %12 = vsyncpa [#allocation4], 0
    %s13 = scalar_lea.sflag [#allocation4], 1
    %14 = vsyncpa %s13, 0
    loop: start=0, step=1, limit=6
    $region2: #{tpu_custom_call.1} parent=1 // loop_pre_header
      _
    $region3: #{tpu_custom_call.1} parent=1 // loop_header
      %s16 = sphi 0, %s20
      %p17 = scmp.ge.s32.totalorder %s16, 6
      %s23 = sphi 0, %s35
      %s24 = sphi 0, %s31
      %s25 = sphi 0, %s23
      %s26 = sphi 0, %s24
      %s27 = sphi 0, %s25
      %s28 = sphi 0, %s26
      %s40 = sphi 0, %s42
      %s43 = sphi 0, %s40
      %s44 = sphi 0, %s43
      %s60 = sphi 0, %s44
      %s64 = sphi 0, %s64
      %s66 = sphi 0, %s64
      %s67 = sphi 0, %s66
      %s81 = sphi 0, %s67
      %s85 = sphi 0, %s85
      %s87 = sphi 0, %s85
      %s88 = sphi 0, %s87
      %s102 = sphi 0, %s88
      %s106 = sphi 0, %s106
      %s108 = sphi 0, %s106
      %s109 = sphi 0, %s108
      %s123 = sphi 0, %s109
      %s131 = sphi 0, %s133
      %s134 = sphi 0, %s131
      %s135 = sphi 0, %s134
      %s151 = sphi 0, %s135
    $region4: #{tpu_custom_call.1} parent=1 // loop_header_branch
      %19 = sbr.rel (%p17) target = $region8
    $region5: #{tpu_custom_call.1} parent=1 // loop_body
      %s21 = ssub.s32 %s16, 1
      %s22 = ssub.s32 %s16, 2
      %s29 = sadd.s32 1, %s24
      %p30 = scmp.ge.s32.totalorder %s29, 2
      %s31 = scalar_select %p30, 0, %s29
      %s32 = sadd.s32 1, %s23
      %s33 = scalar_select %p30, %s32, %s23
      %p34 = scmp.ge.s32.totalorder %s33, 2
      %s35 = scalar_select %p34, 0, %s33
      %s36 = ssub.s32 %s23, %s35
      %s37 = ssub.s32 %s24, %s31
      %s38 = sor.u32 %s36, %s37
      %p39 = scmp.eq.s32.totalorder %s38, 0
      %s41 = sadd.s32 %s40, 1
      %s42 = scalar_select %p39, %s40, %s41
      %p45 = pneg %p39
      %p46 = scmp.eq.s32.totalorder %s16, 3
      %p47 = por %p45, %p46
      %p48 = scmp.ne.s32.totalorder %s40, %s43
      %p49 = scmp.eq.s32.totalorder %s16, 0
      %p50 = por %p48, %p49
      %p51 = scmp.ne.s32.totalorder %s40, %s43
      %p52 = scmp.eq.s32.totalorder %s21, 3
      %p53 = por %p51, %p52
      %p54 = scmp.ne.s32.totalorder %s43, %s44
      %p55 = scmp.eq.s32.totalorder %s21, 0
      %p56 = por %p54, %p55
      %p57 = scmp.ne.s32.totalorder %s43, %s44
      %p58 = scmp.eq.s32.totalorder %s22, 3
      %p59 = por %p57, %p58
      %p61 = scmp.ne.s32.totalorder %s44, %s60
      %p62 = scmp.eq.s32.totalorder %s22, 0
      %p63 = por %p61, %p62
      %s65 = sadd.s32 %s64, 1
      %p68 = scmp.eq.s32.totalorder %s16, 3
      %p69 = scmp.ne.s32.totalorder %s64, %s66
      %p70 = scmp.eq.s32.totalorder %s16, 0
      %p71 = por %p69, %p70
      %p72 = scmp.ne.s32.totalorder %s64, %s66
      %p73 = scmp.eq.s32.totalorder %s21, 3
      %p74 = por %p72, %p73
      %p75 = scmp.ne.s32.totalorder %s66, %s67
      %p76 = scmp.eq.s32.totalorder %s21, 0
      %p77 = por %p75, %p76
      %p78 = scmp.ne.s32.totalorder %s66, %s67
      %p79 = scmp.eq.s32.totalorder %s22, 3
      %p80 = por %p78, %p79
      %p82 = scmp.ne.s32.totalorder %s67, %s81
      %p83 = scmp.eq.s32.totalorder %s22, 0
      %p84 = por %p82, %p83
      %s86 = sadd.s32 %s85, 1
      %p89 = scmp.eq.s32.totalorder %s16, 3
      %p90 = scmp.ne.s32.totalorder %s85, %s87
      %p91 = scmp.eq.s32.totalorder %s16, 0
      %p92 = por %p90, %p91
      %p93 = scmp.ne.s32.totalorder %s85, %s87
      %p94 = scmp.eq.s32.totalorder %s21, 3
      %p95 = por %p93, %p94
      %p96 = scmp.ne.s32.totalorder %s87, %s88
      %p97 = scmp.eq.s32.totalorder %s21, 0
      %p98 = por %p96, %p97
      %p99 = scmp.ne.s32.totalorder %s87, %s88
      %p100 = scmp.eq.s32.totalorder %s22, 3
      %p101 = por %p99, %p100
      %p103 = scmp.ne.s32.totalorder %s88, %s102
      %p104 = scmp.eq.s32.totalorder %s22, 0
      %p105 = por %p103, %p104
      %s107 = sadd.s32 %s106, 1
      %p110 = scmp.eq.s32.totalorder %s16, 3
      %p111 = scmp.ne.s32.totalorder %s106, %s108
      %p112 = scmp.eq.s32.totalorder %s16, 0
      %p113 = por %p111, %p112
      %p114 = scmp.ne.s32.totalorder %s106, %s108
      %p115 = scmp.eq.s32.totalorder %s21, 3
      %p116 = por %p114, %p115
      %p117 = scmp.ne.s32.totalorder %s108, %s109
      %p118 = scmp.eq.s32.totalorder %s21, 0
      %p119 = por %p117, %p118
      %p120 = scmp.ne.s32.totalorder %s108, %s109
      %p121 = scmp.eq.s32.totalorder %s22, 3
      %p122 = por %p120, %p121
      %p124 = scmp.ne.s32.totalorder %s109, %s123
      %p125 = scmp.eq.s32.totalorder %s22, 0
      %p126 = por %p124, %p125
      %s127 = ssub.s32 %s23, %s35
      %s128 = ssub.s32 %s24, %s31
      %s129 = sor.u32 %s127, %s128
      %p130 = scmp.eq.s32.totalorder %s129, 0
      %s132 = sadd.s32 %s131, 1
      %s133 = scalar_select %p130, %s131, %s132
      %p136 = pneg %p130
      %p137 = scmp.eq.s32.totalorder %s16, 3
      %p138 = por %p136, %p137
      %p139 = scmp.ne.s32.totalorder %s131, %s134
      %p140 = scmp.eq.s32.totalorder %s16, 0
      %p141 = por %p139, %p140
      %p142 = scmp.ne.s32.totalorder %s131, %s134
      %p143 = scmp.eq.s32.totalorder %s21, 3
      %p144 = por %p142, %p143
      %p145 = scmp.ne.s32.totalorder %s134, %s135
      %p146 = scmp.eq.s32.totalorder %s21, 0
      %p147 = por %p145, %p146
      %p148 = scmp.ne.s32.totalorder %s134, %s135
      %p149 = scmp.eq.s32.totalorder %s22, 3
      %p150 = por %p148, %p149
      %p152 = scmp.ne.s32.totalorder %s135, %s151
      %p153 = scmp.eq.s32.totalorder %s22, 0
      %p154 = por %p152, %p153
      %p155 = scmp.le.s32.totalorder 1, %s16
      %p156 = scmp.lt.s32.totalorder %s16, 5
      %p157 = pnand %p155, %p156
      %p158 = pneg %p157
      // Predicated region
      $region9: #{tpu_custom_call.1} parent=5 // pred_check
        _
      $region10: #{tpu_custom_call.1} parent=5 // pred_check_branch
        %160 = sbr.rel (%p157) target = $region12
      $region11: #{tpu_custom_call.1} parent=5 // pred_region
        %s161 = ssub.s32 %s16, 1
        // Predicated region
        $region13: #{tpu_custom_call.1} parent=11 // pred_check
          %p162 = pneg %p77
        $region14: #{tpu_custom_call.1} parent=11 // pred_check_branch
          %164 = sbr.rel (%p162) target = $region16
        $region15: #{tpu_custom_call.1} parent=11 // pred_region
          _
        $region16: #{tpu_custom_call.1} parent=11 // pred_fallthru
          _
        // Predicated region
        $region17: #{tpu_custom_call.1} parent=11 // pred_check
          %p165 = pneg %p98
        $region18: #{tpu_custom_call.1} parent=11 // pred_check_branch
          %167 = sbr.rel (%p165) target = $region20
        $region19: #{tpu_custom_call.1} parent=11 // pred_region
          _
        $region20: #{tpu_custom_call.1} parent=11 // pred_fallthru
          _
        // Predicated region
        $region21: #{tpu_custom_call.1} parent=11 // pred_check
          %p168 = pneg %p119
        $region22: #{tpu_custom_call.1} parent=11 // pred_check_branch
          %170 = sbr.rel (%p168) target = $region24
        $region23: #{tpu_custom_call.1} parent=11 // pred_region
          _
        $region24: #{tpu_custom_call.1} parent=11 // pred_fallthru
          _
      $region12: #{tpu_custom_call.1} parent=5 // pred_fallthru
        _
      %p171 = scmp.lt.s32.totalorder %s16, 4
      // Predicated region
      $region25: #{tpu_custom_call.1} parent=5 // pred_check
        %p172 = pneg %p171
      $region26: #{tpu_custom_call.1} parent=5 // pred_check_branch
        %174 = sbr.rel (%p172) target = $region28
      $region27: #{tpu_custom_call.1} parent=5 // pred_region
        // Predicated region
        $region29: #{tpu_custom_call.1} parent=27 // pred_check
          %p175 = pneg %p50
        $region30: #{tpu_custom_call.1} parent=27 // pred_check_branch
          %177 = sbr.rel (%p175) target = $region32
        $region31: #{tpu_custom_call.1} parent=27 // pred_region
          %s178 = sand.u32 %s40, 1
          %s179 = scalar_lea.sflag [#allocation3], %s178
          %s180 = sand.u32 %s40, 1
          %s181 = smul.addr %s180, 64
          %s182 = scalar_lea.vmem [#allocation2], %s181
          %s183 = smul.u32 8, %s24
          %s185 = ssub.s32 1024, 1024
          %186 = vsyncadd %s179, %s185
          %s187 = smul.addr %s23, 16
          %s188 = sadd.s32 %s183, %s187
          %s189 = smul.addr %s188, 128
          %s190 = scalar_lea.hbm %s0, %s189
          %s192 = sshll.u32 %s182, 4
          %s193 = int_to_ptr.vmem [resolvable:$true] %s192
          %195 = dma.hbm_to_vmem [thread:$0]  %s190, 1024, %s193, %s179
        $region32: #{tpu_custom_call.1} parent=27 // pred_fallthru
          _
      $region28: #{tpu_custom_call.1} parent=5 // pred_fallthru
        _
      %p196 = scmp.le.s32.totalorder 1, %s16
      %p197 = scmp.lt.s32.totalorder %s16, 5
      %p198 = pnand %p196, %p197
      %p199 = pneg %p198
      // Predicated region
      $region33: #{tpu_custom_call.1} parent=5 // pred_check
        _
      $region34: #{tpu_custom_call.1} parent=5 // pred_check_branch
        %201 = sbr.rel (%p198) target = $region36
      $region35: #{tpu_custom_call.1} parent=5 // pred_region
        %s202 = ssub.s32 %s16, 1
        %s203 = sand.u32 %s43, 1
        %s204 = scalar_lea.sflag [#allocation3], %s203
        %s205 = sand.u32 %s43, 1
        %s206 = smul.addr %s205, 64
        %s207 = scalar_lea.vmem [#allocation2], %s206
        // Predicated region
        $region37: #{tpu_custom_call.1} parent=35 // pred_check
          %p208 = pneg %p56
        $region38: #{tpu_custom_call.1} parent=35 // pred_check_branch
          %210 = sbr.rel (%p208) target = $region40
        $region39: #{tpu_custom_call.1} parent=35 // pred_region
          %211 = dma.done %s204, 1024
        $region40: #{tpu_custom_call.1} parent=35 // pred_fallthru
          _
        %s212 = sand.u32 %s43, 1
        %s213 = scalar_lea.sflag [#allocation3], %s212
        %s214 = sand.u32 %s43, 1
        %s215 = smul.addr %s214, 64
        %s216 = scalar_lea.vmem [#allocation2], %s215
        %p217 = pneg %p56
        %p218 = pneg %p53
        %p219 = pneg %p77
        %p220 = pneg %p74
        %p221 = pneg %p98
        %p222 = pneg %p95
        %p223 = pneg %p119
        %p224 = pneg %p116
        %p225 = pneg %p147
        %p226 = pneg %p144
        %s227 = sand.u32 %s134, 1
        %s228 = scalar_lea.sflag [#allocation4], %s227
        %s229 = sand.u32 %s134, 1
        %s230 = smul.addr %s229, 64
        %s231 = scalar_lea.vmem [#allocation5], %s230
        %s232 = smul.u32 8, %s26
        %s233 = smul.u32 8, %s26
        %v234 = vld [vmem:[%s207] sm:$0xff]
        %v235 = vld [vmem:[%s207 + $0x8] sm:$0xff]
        %v236 = vld [vmem:[%s207 + $0x10] sm:$0xff]
        %v237 = vld [vmem:[%s207 + $0x18] sm:$0xff]
        %v238 = vld [vmem:[%s207 + $0x20] sm:$0xff]
        %v239 = vld [vmem:[%s207 + $0x28] sm:$0xff]
        %v240 = vld [vmem:[%s207 + $0x30] sm:$0xff]
        %v241 = vld [vmem:[%s207 + $0x38] sm:$0xff]
        %v242 = vld [vmem:[%s1] sm:$0xff]
        %v243 = vld [vmem:[%s1 + $0x8] sm:$0xff]
        %vm244 = vcmask 64512
        %v246 = vsel %vm244, %v242, 0
        %v249 = vsel %vm244, %v243, 0
        %251 = vmatprep.subr.mxu0 0.0
        %252 = vmatpush1.msra.mxu0 0.0
        %253 = vmatprep.subr.mxu0 0.0
        %254 = vmatpush1.msra.mxu0 0.0
        %255 = vmatprep.subr.mxu0 0.0
        %256 = vmatpush1.msra.mxu0 0.0
        %257 = vmatprep.subr.mxu0 0.0
        %258 = vmatpush1.msra.mxu0 0.0
        %259 = vmatprep.subr.mxu0 0.0
        %260 = vmatpush1.msra.mxu0 0.0
        %261 = vmatprep.subr.mxu0 0.0
        %262 = vmatpush1.msra.mxu0 0.0
        %263 = vmatprep.subr.mxu0 0.0
        %264 = vmatpush1.msra.mxu0 0.0
        %265 = vmatprep.subr.mxu0 0.0
        %266 = vmatpush1.msra.mxu0 0.0
        %267 = vmatprep.subr.mxu0 0.0
        %268 = vmatpush1.msra.mxu0 0.0
        %269 = vmatprep.subr.mxu0 0.0
        %270 = vmatpush1.msra.mxu0 0.0
        %271 = vmatprep.subr.mxu0 0.0
        %272 = vmatpush1.msra.mxu0 0.0
        %273 = vmatprep.subr.mxu0 0.0
        %274 = vmatpush1.msra.mxu0 0.0
        %275 = vmatprep.subr.mxu0 0.0
        %276 = vmatpush1.msra.mxu0 0.0
        %277 = vmatprep.subr.mxu0 0.0
        %278 = vmatpush1.msra.mxu0 0.0
        %279 = vmatprep.subr.mxu0 0.0
        %280 = vmatpush1.msra.mxu0 0.0
        %281 = vmatprep.subr.mxu0 %v235
        %282 = vmatpush1.msra.mxu0 %v234
        %283 = vmatprep.subr.mxu0 0.0
        %284 = vmatpush2.msra.mxu0 0.0
        %285 = vmatprep.subr.mxu0 0.0
        %286 = vmatpush2.msra.mxu0 0.0
        %287 = vmatprep.subr.mxu0 0.0
        %288 = vmatpush2.msra.mxu0 0.0
        %289 = vmatprep.subr.mxu0 0.0
        %290 = vmatpush2.msra.mxu0 0.0
        %291 = vmatprep.subr.mxu0 0.0
        %292 = vmatpush2.msra.mxu0 0.0
        %293 = vmatprep.subr.mxu0 0.0
        %294 = vmatpush2.msra.mxu0 0.0
        %295 = vmatprep.subr.mxu0 0.0
        %296 = vmatpush2.msra.mxu0 0.0
        %297 = vmatprep.subr.mxu0 0.0
        %298 = vmatpush2.msra.mxu0 0.0
        %299 = vmatprep.subr.mxu0 0.0
        %300 = vmatpush2.msra.mxu0 0.0
        %301 = vmatprep.subr.mxu0 0.0
        %302 = vmatpush2.msra.mxu0 0.0
        %303 = vmatprep.subr.mxu0 0.0
        %304 = vmatpush2.msra.mxu0 0.0
        %305 = vmatprep.subr.mxu0 0.0
        %306 = vmatpush2.msra.mxu0 0.0
        %307 = vmatprep.subr.mxu0 0.0
        %308 = vmatpush2.msra.mxu0 0.0
        %309 = vmatprep.subr.mxu0 0.0
        %310 = vmatpush2.msra.mxu0 0.0
        %311 = vmatprep.subr.mxu0 0.0
        %312 = vmatpush2.msra.mxu0 0.0
        %313 = vmatprep.subr.mxu0 0.0
        %314 = vmatpush2.msra.mxu0 0.0
        %315 = vmatprep.mubr.f32.mxu0 0.0
        %316 = vmatmul.mubr.f32.gmra.mxu0 %v246
        %v317 = vpop.f32.mrf.mxu0
        %v318 = vadd.f32 0.0, %v317
        %v319 = vpop.f32.mrf.mxu0
        %v320 = vadd.f32 0.0, %v319
        %321 = vmatprep.mubr.f32.mxu0 0.0
        %322 = vmatmul.mubr.f32.gmra.mxu0 %v249
        %v323 = vpop.f32.mrf.mxu0
        %v324 = vadd.f32 0.0, %v323
        %v325 = vpop.f32.mrf.mxu0
        %v326 = vadd.f32 0.0, %v325
        %327 = vdwg.mxu0
        %328 = vmatprep.subr.mxu0 0.0
        %329 = vmatpush1.msra.mxu0 0.0
        %330 = vmatprep.subr.mxu0 0.0
        %331 = vmatpush1.msra.mxu0 0.0
        %332 = vmatprep.subr.mxu0 0.0
        %333 = vmatpush1.msra.mxu0 0.0
        %334 = vmatprep.subr.mxu0 0.0
        %335 = vmatpush1.msra.mxu0 0.0
        %336 = vmatprep.subr.mxu0 0.0
        %337 = vmatpush1.msra.mxu0 0.0
        %338 = vmatprep.subr.mxu0 0.0
        %339 = vmatpush1.msra.mxu0 0.0
        %340 = vmatprep.subr.mxu0 0.0
        %341 = vmatpush1.msra.mxu0 0.0
        %342 = vmatprep.subr.mxu0 0.0
        %343 = vmatpush1.msra.mxu0 0.0
        %344 = vmatprep.subr.mxu0 0.0
        %345 = vmatpush1.msra.mxu0 0.0
        %346 = vmatprep.subr.mxu0 0.0
        %347 = vmatpush1.msra.mxu0 0.0
        %348 = vmatprep.subr.mxu0 0.0
        %349 = vmatpush1.msra.mxu0 0.0
        %350 = vmatprep.subr.mxu0 0.0
        %351 = vmatpush1.msra.mxu0 0.0
        %352 = vmatprep.subr.mxu0 0.0
        %353 = vmatpush1.msra.mxu0 0.0
        %354 = vmatprep.subr.mxu0 0.0
        %355 = vmatpush1.msra.mxu0 0.0
        %356 = vmatprep.subr.mxu0 0.0
        %357 = vmatpush1.msra.mxu0 0.0
        %358 = vmatprep.subr.mxu0 %v237
        %359 = vmatpush1.msra.mxu0 %v236
        %360 = vmatprep.subr.mxu0 0.0
        %361 = vmatpush2.msra.mxu0 0.0
        %362 = vmatprep.subr.mxu0 0.0
        %363 = vmatpush2.msra.mxu0 0.0
        %364 = vmatprep.subr.mxu0 0.0
        %365 = vmatpush2.msra.mxu0 0.0
        %366 = vmatprep.subr.mxu0 0.0
        %367 = vmatpush2.msra.mxu0 0.0
        %368 = vmatprep.subr.mxu0 0.0
        %369 = vmatpush2.msra.mxu0 0.0
        %370 = vmatprep.subr.mxu0 0.0
        %371 = vmatpush2.msra.mxu0 0.0
        %372 = vmatprep.subr.mxu0 0.0
        %373 = vmatpush2.msra.mxu0 0.0
        %374 = vmatprep.subr.mxu0 0.0
        %375 = vmatpush2.msra.mxu0 0.0
        %376 = vmatprep.subr.mxu0 0.0
        %377 = vmatpush2.msra.mxu0 0.0
        %378 = vmatprep.subr.mxu0 0.0
        %379 = vmatpush2.msra.mxu0 0.0
        %380 = vmatprep.subr.mxu0 0.0
        %381 = vmatpush2.msra.mxu0 0.0
        %382 = vmatprep.subr.mxu0 0.0
        %383 = vmatpush2.msra.mxu0 0.0
        %384 = vmatprep.subr.mxu0 0.0
        %385 = vmatpush2.msra.mxu0 0.0
        %386 = vmatprep.subr.mxu0 0.0
        %387 = vmatpush2.msra.mxu0 0.0
        %388 = vmatprep.subr.mxu0 0.0
        %389 = vmatpush2.msra.mxu0 0.0
        %390 = vmatprep.subr.mxu0 0.0
        %391 = vmatpush2.msra.mxu0 0.0
        %392 = vmatprep.mubr.f32.mxu0 0.0
        %393 = vmatmul.mubr.f32.gmra.mxu0 %v246
        %v394 = vpop.f32.mrf.mxu0
        %v395 = vadd.f32 0.0, %v394
        %v396 = vpop.f32.mrf.mxu0
        %v397 = vadd.f32 0.0, %v396
        %398 = vmatprep.mubr.f32.mxu0 0.0
        %399 = vmatmul.mubr.f32.gmra.mxu0 %v249
        %v400 = vpop.f32.mrf.mxu0
        %v401 = vadd.f32 0.0, %v400
        %v402 = vpop.f32.mrf.mxu0
        %v403 = vadd.f32 0.0, %v402
        %404 = vdwg.mxu0
        %405 = vmatprep.subr.mxu0 0.0
        %406 = vmatpush1.msra.mxu0 0.0
        %407 = vmatprep.subr.mxu0 0.0
        %408 = vmatpush1.msra.mxu0 0.0
        %409 = vmatprep.subr.mxu0 0.0
        %410 = vmatpush1.msra.mxu0 0.0
        %411 = vmatprep.subr.mxu0 0.0
        %412 = vmatpush1.msra.mxu0 0.0
        %413 = vmatprep.subr.mxu0 0.0
        %414 = vmatpush1.msra.mxu0 0.0
        %415 = vmatprep.subr.mxu0 0.0
        %416 = vmatpush1.msra.mxu0 0.0
        %417 = vmatprep.subr.mxu0 0.0
        %418 = vmatpush1.msra.mxu0 0.0
        %419 = vmatprep.subr.mxu0 0.0
        %420 = vmatpush1.msra.mxu0 0.0
        %421 = vmatprep.subr.mxu0 0.0
        %422 = vmatpush1.msra.mxu0 0.0
        %423 = vmatprep.subr.mxu0 0.0
        %424 = vmatpush1.msra.mxu0 0.0
        %425 = vmatprep.subr.mxu0 0.0
        %426 = vmatpush1.msra.mxu0 0.0
        %427 = vmatprep.subr.mxu0 0.0
        %428 = vmatpush1.msra.mxu0 0.0
        %429 = vmatprep.subr.mxu0 0.0
        %430 = vmatpush1.msra.mxu0 0.0
        %431 = vmatprep.subr.mxu0 0.0
        %432 = vmatpush1.msra.mxu0 0.0
        %433 = vmatprep.subr.mxu0 0.0
        %434 = vmatpush1.msra.mxu0 0.0
        %435 = vmatprep.subr.mxu0 %v239
        %436 = vmatpush1.msra.mxu0 %v238
        %437 = vmatprep.subr.mxu0 0.0
        %438 = vmatpush2.msra.mxu0 0.0
        %439 = vmatprep.subr.mxu0 0.0
        %440 = vmatpush2.msra.mxu0 0.0
        %441 = vmatprep.subr.mxu0 0.0
        %442 = vmatpush2.msra.mxu0 0.0
        %443 = vmatprep.subr.mxu0 0.0
        %444 = vmatpush2.msra.mxu0 0.0
        %445 = vmatprep.subr.mxu0 0.0
        %446 = vmatpush2.msra.mxu0 0.0
        %447 = vmatprep.subr.mxu0 0.0
        %448 = vmatpush2.msra.mxu0 0.0
        %449 = vmatprep.subr.mxu0 0.0
        %450 = vmatpush2.msra.mxu0 0.0
        %451 = vmatprep.subr.mxu0 0.0
        %452 = vmatpush2.msra.mxu0 0.0
        %453 = vmatprep.subr.mxu0 0.0
        %454 = vmatpush2.msra.mxu0 0.0
        %455 = vmatprep.subr.mxu0 0.0
        %456 = vmatpush2.msra.mxu0 0.0
        %457 = vmatprep.subr.mxu0 0.0
        %458 = vmatpush2.msra.mxu0 0.0
        %459 = vmatprep.subr.mxu0 0.0
        %460 = vmatpush2.msra.mxu0 0.0
        %461 = vmatprep.subr.mxu0 0.0
        %462 = vmatpush2.msra.mxu0 0.0
        %463 = vmatprep.subr.mxu0 0.0
        %464 = vmatpush2.msra.mxu0 0.0
        %465 = vmatprep.subr.mxu0 0.0
        %466 = vmatpush2.msra.mxu0 0.0
        %467 = vmatprep.subr.mxu0 0.0
        %468 = vmatpush2.msra.mxu0 0.0
        %469 = vmatprep.mubr.f32.mxu0 0.0
        %470 = vmatmul.mubr.f32.gmra.mxu0 %v246
        %v471 = vpop.f32.mrf.mxu0
        %v472 = vadd.f32 0.0, %v471
        %v473 = vpop.f32.mrf.mxu0
        %v474 = vadd.f32 0.0, %v473
        %475 = vmatprep.mubr.f32.mxu0 0.0
        %476 = vmatmul.mubr.f32.gmra.mxu0 %v249
        %v477 = vpop.f32.mrf.mxu0
        %v478 = vadd.f32 0.0, %v477
        %v479 = vpop.f32.mrf.mxu0
        %v480 = vadd.f32 0.0, %v479
        %481 = vdwg.mxu0
        %482 = vmatprep.subr.mxu0 0.0
        %483 = vmatpush1.msra.mxu0 0.0
        %484 = vmatprep.subr.mxu0 0.0
        %485 = vmatpush1.msra.mxu0 0.0
        %486 = vmatprep.subr.mxu0 0.0
        %487 = vmatpush1.msra.mxu0 0.0
        %488 = vmatprep.subr.mxu0 0.0
        %489 = vmatpush1.msra.mxu0 0.0
        %490 = vmatprep.subr.mxu0 0.0
        %491 = vmatpush1.msra.mxu0 0.0
        %492 = vmatprep.subr.mxu0 0.0
        %493 = vmatpush1.msra.mxu0 0.0
        %494 = vmatprep.subr.mxu0 0.0
        %495 = vmatpush1.msra.mxu0 0.0
        %496 = vmatprep.subr.mxu0 0.0
        %497 = vmatpush1.msra.mxu0 0.0
        %498 = vmatprep.subr.mxu0 0.0
        %499 = vmatpush1.msra.mxu0 0.0
        %500 = vmatprep.subr.mxu0 0.0
        %501 = vmatpush1.msra.mxu0 0.0
        %502 = vmatprep.subr.mxu0 0.0
        %503 = vmatpush1.msra.mxu0 0.0
        %504 = vmatprep.subr.mxu0 0.0
        %505 = vmatpush1.msra.mxu0 0.0
        %506 = vmatprep.subr.mxu0 0.0
        %507 = vmatpush1.msra.mxu0 0.0
        %508 = vmatprep.subr.mxu0 0.0
        %509 = vmatpush1.msra.mxu0 0.0
        %510 = vmatprep.subr.mxu0 0.0
        %511 = vmatpush1.msra.mxu0 0.0
        %512 = vmatprep.subr.mxu0 %v241
        %513 = vmatpush1.msra.mxu0 %v240
        %514 = vmatprep.subr.mxu0 0.0
        %515 = vmatpush2.msra.mxu0 0.0
        %516 = vmatprep.subr.mxu0 0.0
        %517 = vmatpush2.msra.mxu0 0.0
        %518 = vmatprep.subr.mxu0 0.0
        %519 = vmatpush2.msra.mxu0 0.0
        %520 = vmatprep.subr.mxu0 0.0
        %521 = vmatpush2.msra.mxu0 0.0
        %522 = vmatprep.subr.mxu0 0.0
        %523 = vmatpush2.msra.mxu0 0.0
        %524 = vmatprep.subr.mxu0 0.0
        %525 = vmatpush2.msra.mxu0 0.0
        %526 = vmatprep.subr.mxu0 0.0
        %527 = vmatpush2.msra.mxu0 0.0
        %528 = vmatprep.subr.mxu0 0.0
        %529 = vmatpush2.msra.mxu0 0.0
        %530 = vmatprep.subr.mxu0 0.0
        %531 = vmatpush2.msra.mxu0 0.0
        %532 = vmatprep.subr.mxu0 0.0
        %533 = vmatpush2.msra.mxu0 0.0
        %534 = vmatprep.subr.mxu0 0.0
        %535 = vmatpush2.msra.mxu0 0.0
        %536 = vmatprep.subr.mxu0 0.0
        %537 = vmatpush2.msra.mxu0 0.0
        %538 = vmatprep.subr.mxu0 0.0
        %539 = vmatpush2.msra.mxu0 0.0
        %540 = vmatprep.subr.mxu0 0.0
        %541 = vmatpush2.msra.mxu0 0.0
        %542 = vmatprep.subr.mxu0 0.0
        %543 = vmatpush2.msra.mxu0 0.0
        %544 = vmatprep.subr.mxu0 0.0
        %545 = vmatpush2.msra.mxu0 0.0
        %546 = vmatprep.mubr.f32.mxu0 0.0
        %547 = vmatmul.mubr.f32.gmra.mxu0 %v246
        %v548 = vpop.f32.mrf.mxu0
        %v549 = vadd.f32 0.0, %v548
        %v550 = vpop.f32.mrf.mxu0
        %v551 = vadd.f32 0.0, %v550
        %552 = vmatprep.mubr.f32.mxu0 0.0
        %553 = vmatmul.mubr.f32.gmra.mxu0 %v249
        %v554 = vpop.f32.mrf.mxu0
        %v555 = vadd.f32 0.0, %v554
        %v556 = vpop.f32.mrf.mxu0
        %v557 = vadd.f32 0.0, %v556
        %558 = vdwg.mxu0
        %v559 = vld [vmem:[%s2] sm:$0xff]
        %v560 = vld [vmem:[%s3] sm:$0xff]
        %562 = vset.pattern.permute.xlu0 0
        %563 = vperm.xlu0 %562, %v560
        %v564 = vpop.permute.xlu0 %563
        %vm566 = vcmask 130048
        %v568 = vsel %vm566, %v559, 0
        %570 = vmatprep.subr.mxu0 0.0
        %571 = vmatpush1.msra.mxu0 0.0
        %572 = vmatprep.subr.mxu0 0.0
        %573 = vmatpush1.msra.mxu0 0.0
        %574 = vmatprep.subr.mxu0 0.0
        %575 = vmatpush1.msra.mxu0 0.0
        %576 = vmatprep.subr.mxu0 0.0
        %577 = vmatpush1.msra.mxu0 0.0
        %578 = vmatprep.subr.mxu0 0.0
        %579 = vmatpush1.msra.mxu0 0.0
        %580 = vmatprep.subr.mxu0 0.0
        %581 = vmatpush1.msra.mxu0 0.0
        %582 = vmatprep.subr.mxu0 0.0
        %583 = vmatpush1.msra.mxu0 0.0
        %584 = vmatprep.subr.mxu0 0.0
        %585 = vmatpush1.msra.mxu0 0.0
        %586 = vmatprep.subr.mxu0 0.0
        %587 = vmatpush1.msra.mxu0 0.0
        %588 = vmatprep.subr.mxu0 0.0
        %589 = vmatpush1.msra.mxu0 0.0
        %590 = vmatprep.subr.mxu0 0.0
        %591 = vmatpush1.msra.mxu0 0.0
        %592 = vmatprep.subr.mxu0 0.0
        %593 = vmatpush1.msra.mxu0 0.0
        %594 = vmatprep.subr.mxu0 0.0
        %595 = vmatpush1.msra.mxu0 0.0
        %596 = vmatprep.subr.mxu0 0.0
        %597 = vmatpush1.msra.mxu0 0.0
        %598 = vmatprep.subr.mxu0 %v326
        %599 = vmatpush1.msra.mxu0 %v324
        %600 = vmatprep.subr.mxu0 %v320
        %601 = vmatpush1.msra.mxu0 %v318
        %602 = vmatprep.subr.mxu0 0.0
        %603 = vmatpush2.msra.mxu0 0.0
        %604 = vmatprep.subr.mxu0 0.0
        %605 = vmatpush2.msra.mxu0 0.0
        %606 = vmatprep.subr.mxu0 0.0
        %607 = vmatpush2.msra.mxu0 0.0
        %608 = vmatprep.subr.mxu0 0.0
        %609 = vmatpush2.msra.mxu0 0.0
        %610 = vmatprep.subr.mxu0 0.0
        %611 = vmatpush2.msra.mxu0 0.0
        %612 = vmatprep.subr.mxu0 0.0
        %613 = vmatpush2.msra.mxu0 0.0
        %614 = vmatprep.subr.mxu0 0.0
        %615 = vmatpush2.msra.mxu0 0.0
        %616 = vmatprep.subr.mxu0 0.0
        %617 = vmatpush2.msra.mxu0 0.0
        %618 = vmatprep.subr.mxu0 0.0
        %619 = vmatpush2.msra.mxu0 0.0
        %620 = vmatprep.subr.mxu0 0.0
        %621 = vmatpush2.msra.mxu0 0.0
        %622 = vmatprep.subr.mxu0 0.0
        %623 = vmatpush2.msra.mxu0 0.0
        %624 = vmatprep.subr.mxu0 0.0
        %625 = vmatpush2.msra.mxu0 0.0
        %626 = vmatprep.subr.mxu0 0.0
        %627 = vmatpush2.msra.mxu0 0.0
        %628 = vmatprep.subr.mxu0 0.0
        %629 = vmatpush2.msra.mxu0 0.0
        %630 = vmatprep.subr.mxu0 0.0
        %631 = vmatpush2.msra.mxu0 0.0
        %632 = vmatprep.subr.mxu0 0.0
        %633 = vmatpush2.msra.mxu0 0.0
        %634 = vmatprep.mubr.f32.mxu0 0.0
        %635 = vmatmul.mubr.f32.gmra.mxu0 %v568
        %v636 = vpop.f32.mrf.mxu0
        %v637 = vadd.f32 %v564, %v636
        %v638 = vpop.f32.mrf.mxu0
        %v639 = vadd.f32 %v564, %v638
        %640 = vdwg.mxu0
        %641 = vmatprep.subr.mxu0 0.0
        %642 = vmatpush1.msra.mxu0 0.0
        %643 = vmatprep.subr.mxu0 0.0
        %644 = vmatpush1.msra.mxu0 0.0
        %645 = vmatprep.subr.mxu0 0.0
        %646 = vmatpush1.msra.mxu0 0.0
        %647 = vmatprep.subr.mxu0 0.0
        %648 = vmatpush1.msra.mxu0 0.0
        %649 = vmatprep.subr.mxu0 0.0
        %650 = vmatpush1.msra.mxu0 0.0
        %651 = vmatprep.subr.mxu0 0.0
        %652 = vmatpush1.msra.mxu0 0.0
        %653 = vmatprep.subr.mxu0 0.0
        %654 = vmatpush1.msra.mxu0 0.0
        %655 = vmatprep.subr.mxu0 0.0
        %656 = vmatpush1.msra.mxu0 0.0
        %657 = vmatprep.subr.mxu0 0.0
        %658 = vmatpush1.msra.mxu0 0.0
        %659 = vmatprep.subr.mxu0 0.0
        %660 = vmatpush1.msra.mxu0 0.0
        %661 = vmatprep.subr.mxu0 0.0
        %662 = vmatpush1.msra.mxu0 0.0
        %663 = vmatprep.subr.mxu0 0.0
        %664 = vmatpush1.msra.mxu0 0.0
        %665 = vmatprep.subr.mxu0 0.0
        %666 = vmatpush1.msra.mxu0 0.0
        %667 = vmatprep.subr.mxu0 0.0
        %668 = vmatpush1.msra.mxu0 0.0
        %669 = vmatprep.subr.mxu0 %v403
        %670 = vmatpush1.msra.mxu0 %v401
        %671 = vmatprep.subr.mxu0 %v397
        %672 = vmatpush1.msra.mxu0 %v395
        %673 = vmatprep.subr.mxu0 0.0
        %674 = vmatpush2.msra.mxu0 0.0
        %675 = vmatprep.subr.mxu0 0.0
        %676 = vmatpush2.msra.mxu0 0.0
        %677 = vmatprep.subr.mxu0 0.0
        %678 = vmatpush2.msra.mxu0 0.0
        %679 = vmatprep.subr.mxu0 0.0
        %680 = vmatpush2.msra.mxu0 0.0
        %681 = vmatprep.subr.mxu0 0.0
        %682 = vmatpush2.msra.mxu0 0.0
        %683 = vmatprep.subr.mxu0 0.0
        %684 = vmatpush2.msra.mxu0 0.0
        %685 = vmatprep.subr.mxu0 0.0
        %686 = vmatpush2.msra.mxu0 0.0
        %687 = vmatprep.subr.mxu0 0.0
        %688 = vmatpush2.msra.mxu0 0.0
        %689 = vmatprep.subr.mxu0 0.0
        %690 = vmatpush2.msra.mxu0 0.0
        %691 = vmatprep.subr.mxu0 0.0
        %692 = vmatpush2.msra.mxu0 0.0
        %693 = vmatprep.subr.mxu0 0.0
        %694 = vmatpush2.msra.mxu0 0.0
        %695 = vmatprep.subr.mxu0 0.0
        %696 = vmatpush2.msra.mxu0 0.0
        %697 = vmatprep.subr.mxu0 0.0
        %698 = vmatpush2.msra.mxu0 0.0
        %699 = vmatprep.subr.mxu0 0.0
        %700 = vmatpush2.msra.mxu0 0.0
        %701 = vmatprep.subr.mxu0 0.0
        %702 = vmatpush2.msra.mxu0 0.0
        %703 = vmatprep.subr.mxu0 0.0
        %704 = vmatpush2.msra.mxu0 0.0
        %705 = vmatprep.mubr.f32.mxu0 0.0
        %706 = vmatmul.mubr.f32.gmra.mxu0 %v568
        %v707 = vpop.f32.mrf.mxu0
        %v708 = vadd.f32 %v564, %v707
        %v709 = vpop.f32.mrf.mxu0
        %v710 = vadd.f32 %v564, %v709
        %711 = vdwg.mxu0
        %712 = vmatprep.subr.mxu0 0.0
        %713 = vmatpush1.msra.mxu0 0.0
        %714 = vmatprep.subr.mxu0 0.0
        %715 = vmatpush1.msra.mxu0 0.0
        %716 = vmatprep.subr.mxu0 0.0
        %717 = vmatpush1.msra.mxu0 0.0
        %718 = vmatprep.subr.mxu0 0.0
        %719 = vmatpush1.msra.mxu0 0.0
        %720 = vmatprep.subr.mxu0 0.0
        %721 = vmatpush1.msra.mxu0 0.0
        %722 = vmatprep.subr.mxu0 0.0
        %723 = vmatpush1.msra.mxu0 0.0
        %724 = vmatprep.subr.mxu0 0.0
        %725 = vmatpush1.msra.mxu0 0.0
        %726 = vmatprep.subr.mxu0 0.0
        %727 = vmatpush1.msra.mxu0 0.0
        %728 = vmatprep.subr.mxu0 0.0
        %729 = vmatpush1.msra.mxu0 0.0
        %730 = vmatprep.subr.mxu0 0.0
        %731 = vmatpush1.msra.mxu0 0.0
        %732 = vmatprep.subr.mxu0 0.0
        %733 = vmatpush1.msra.mxu0 0.0
        %734 = vmatprep.subr.mxu0 0.0
        %735 = vmatpush1.msra.mxu0 0.0
        %736 = vmatprep.subr.mxu0 0.0
        %737 = vmatpush1.msra.mxu0 0.0
        %738 = vmatprep.subr.mxu0 0.0
        %739 = vmatpush1.msra.mxu0 0.0
        %740 = vmatprep.subr.mxu0 %v480
        %741 = vmatpush1.msra.mxu0 %v478
        %742 = vmatprep.subr.mxu0 %v474
        %743 = vmatpush1.msra.mxu0 %v472
        %744 = vmatprep.subr.mxu0 0.0
        %745 = vmatpush2.msra.mxu0 0.0
        %746 = vmatprep.subr.mxu0 0.0
        %747 = vmatpush2.msra.mxu0 0.0
        %748 = vmatprep.subr.mxu0 0.0
        %749 = vmatpush2.msra.mxu0 0.0
        %750 = vmatprep.subr.mxu0 0.0
        %751 = vmatpush2.msra.mxu0 0.0
        %752 = vmatprep.subr.mxu0 0.0
        %753 = vmatpush2.msra.mxu0 0.0
        %754 = vmatprep.subr.mxu0 0.0
        %755 = vmatpush2.msra.mxu0 0.0
        %756 = vmatprep.subr.mxu0 0.0
        %757 = vmatpush2.msra.mxu0 0.0
        %758 = vmatprep.subr.mxu0 0.0
        %759 = vmatpush2.msra.mxu0 0.0
        %760 = vmatprep.subr.mxu0 0.0
        %761 = vmatpush2.msra.mxu0 0.0
        %762 = vmatprep.subr.mxu0 0.0
        %763 = vmatpush2.msra.mxu0 0.0
        %764 = vmatprep.subr.mxu0 0.0
        %765 = vmatpush2.msra.mxu0 0.0
        %766 = vmatprep.subr.mxu0 0.0
        %767 = vmatpush2.msra.mxu0 0.0
        %768 = vmatprep.subr.mxu0 0.0
        %769 = vmatpush2.msra.mxu0 0.0
        %770 = vmatprep.subr.mxu0 0.0
        %771 = vmatpush2.msra.mxu0 0.0
        %772 = vmatprep.subr.mxu0 0.0
        %773 = vmatpush2.msra.mxu0 0.0
        %774 = vmatprep.subr.mxu0 0.0
        %775 = vmatpush2.msra.mxu0 0.0
        %776 = vmatprep.mubr.f32.mxu0 0.0
        %777 = vmatmul.mubr.f32.gmra.mxu0 %v568
        %v778 = vpop.f32.mrf.mxu0
        %v779 = vadd.f32 %v564, %v778
        %v780 = vpop.f32.mrf.mxu0
        %v781 = vadd.f32 %v564, %v780
        %782 = vdwg.mxu0
        %783 = vmatprep.subr.mxu0 0.0
        %784 = vmatpush1.msra.mxu0 0.0
        %785 = vmatprep.subr.mxu0 0.0
        %786 = vmatpush1.msra.mxu0 0.0
        %787 = vmatprep.subr.mxu0 0.0
        %788 = vmatpush1.msra.mxu0 0.0
        %789 = vmatprep.subr.mxu0 0.0
        %790 = vmatpush1.msra.mxu0 0.0
        %791 = vmatprep.subr.mxu0 0.0
        %792 = vmatpush1.msra.mxu0 0.0
        %793 = vmatprep.subr.mxu0 0.0
        %794 = vmatpush1.msra.mxu0 0.0
        %795 = vmatprep.subr.mxu0 0.0
        %796 = vmatpush1.msra.mxu0 0.0
        %797 = vmatprep.subr.mxu0 0.0
        %798 = vmatpush1.msra.mxu0 0.0
        %799 = vmatprep.subr.mxu0 0.0
        %800 = vmatpush1.msra.mxu0 0.0
        %801 = vmatprep.subr.mxu0 0.0
        %802 = vmatpush1.msra.mxu0 0.0
        %803 = vmatprep.subr.mxu0 0.0
        %804 = vmatpush1.msra.mxu0 0.0
        %805 = vmatprep.subr.mxu0 0.0
        %806 = vmatpush1.msra.mxu0 0.0
        %807 = vmatprep.subr.mxu0 0.0
        %808 = vmatpush1.msra.mxu0 0.0
        %809 = vmatprep.subr.mxu0 0.0
        %810 = vmatpush1.msra.mxu0 0.0
        %811 = vmatprep.subr.mxu0 %v557
        %812 = vmatpush1.msra.mxu0 %v555
        %813 = vmatprep.subr.mxu0 %v551
        %814 = vmatpush1.msra.mxu0 %v549
        %815 = vmatprep.subr.mxu0 0.0
        %816 = vmatpush2.msra.mxu0 0.0
        %817 = vmatprep.subr.mxu0 0.0
        %818 = vmatpush2.msra.mxu0 0.0
        %819 = vmatprep.subr.mxu0 0.0
        %820 = vmatpush2.msra.mxu0 0.0
        %821 = vmatprep.subr.mxu0 0.0
        %822 = vmatpush2.msra.mxu0 0.0
        %823 = vmatprep.subr.mxu0 0.0
        %824 = vmatpush2.msra.mxu0 0.0
        %825 = vmatprep.subr.mxu0 0.0
        %826 = vmatpush2.msra.mxu0 0.0
        %827 = vmatprep.subr.mxu0 0.0
        %828 = vmatpush2.msra.mxu0 0.0
        %829 = vmatprep.subr.mxu0 0.0
        %830 = vmatpush2.msra.mxu0 0.0
        %831 = vmatprep.subr.mxu0 0.0
        %832 = vmatpush2.msra.mxu0 0.0
        %833 = vmatprep.subr.mxu0 0.0
        %834 = vmatpush2.msra.mxu0 0.0
        %835 = vmatprep.subr.mxu0 0.0
        %836 = vmatpush2.msra.mxu0 0.0
        %837 = vmatprep.subr.mxu0 0.0
        %838 = vmatpush2.msra.mxu0 0.0
        %839 = vmatprep.subr.mxu0 0.0
        %840 = vmatpush2.msra.mxu0 0.0
        %841 = vmatprep.subr.mxu0 0.0
        %842 = vmatpush2.msra.mxu0 0.0
        %843 = vmatprep.subr.mxu0 0.0
        %844 = vmatpush2.msra.mxu0 0.0
        %845 = vmatprep.subr.mxu0 0.0
        %846 = vmatpush2.msra.mxu0 0.0
        %847 = vmatprep.mubr.f32.mxu0 0.0
        %848 = vmatmul.mubr.f32.gmra.mxu0 %v568
        %v849 = vpop.f32.mrf.mxu0
        %v850 = vadd.f32 %v564, %v849
        %v851 = vpop.f32.mrf.mxu0
        %v852 = vadd.f32 %v564, %v851
        %853 = vdwg.mxu0
        %854 = vst [vmem:[%s231] sm:$0xff] %v637
        %855 = vst [vmem:[%s231 + $0x8] sm:$0xff] %v639
        %856 = vst [vmem:[%s231 + $0x10] sm:$0xff] %v708
        %857 = vst [vmem:[%s231 + $0x18] sm:$0xff] %v710
        %858 = vst [vmem:[%s231 + $0x20] sm:$0xff] %v779
        %859 = vst [vmem:[%s231 + $0x28] sm:$0xff] %v781
        %860 = vst [vmem:[%s231 + $0x30] sm:$0xff] %v850
        %861 = vst [vmem:[%s231 + $0x38] sm:$0xff] %v852
        %s862 = sand.u32 %s134, 1
        %s863 = scalar_lea.sflag [#allocation4], %s862
        %s864 = sand.u32 %s134, 1
        %s865 = smul.addr %s864, 64
        %s866 = scalar_lea.vmem [#allocation5], %s865
        // Predicated region
        $region41: #{tpu_custom_call.1} parent=35 // pred_check
          %p867 = pneg %p144
        $region42: #{tpu_custom_call.1} parent=35 // pred_check_branch
          %869 = sbr.rel (%p867) target = $region44
        $region43: #{tpu_custom_call.1} parent=35 // pred_region
          %s870 = smul.u32 8, %s26
          %s872 = ssub.s32 1024, 1024
          %873 = vsyncadd %s863, %s872
          %s874 = smul.addr %s25, 16
          %s875 = sadd.s32 %s870, %s874
          %s876 = smul.addr %s875, 128
          %s877 = scalar_lea.hbm %s4, %s876
          %s879 = sshll.u32 %s866, 4
          %s880 = int_to_ptr.vmem [resolvable:$true] %s879
          %882 = dma.vmem_to_hbm [thread:$0]  %s880, 1024, %s877, %s863
        $region44: #{tpu_custom_call.1} parent=35 // pred_fallthru
          _
      $region36: #{tpu_custom_call.1} parent=5 // pred_fallthru
        _
      %p883 = scmp.le.s32.totalorder 2, %s16
      // Predicated region
      $region45: #{tpu_custom_call.1} parent=5 // pred_check
        %p884 = pneg %p883
      $region46: #{tpu_custom_call.1} parent=5 // pred_check_branch
        %886 = sbr.rel (%p884) target = $region48
      $region47: #{tpu_custom_call.1} parent=5 // pred_region
        %s887 = ssub.s32 %s16, 2
        // Predicated region
        $region49: #{tpu_custom_call.1} parent=47 // pred_check
          %p888 = pneg %p150
        $region50: #{tpu_custom_call.1} parent=47 // pred_check_branch
          %890 = sbr.rel (%p888) target = $region52
        $region51: #{tpu_custom_call.1} parent=47 // pred_region
          %s891 = sand.u32 %s135, 1
          %s892 = scalar_lea.sflag [#allocation4], %s891
          %s893 = sand.u32 %s135, 1
          %s894 = smul.addr %s893, 64
          %s895 = scalar_lea.vmem [#allocation5], %s894
          %896 = dma.done %s892, 1024
        $region52: #{tpu_custom_call.1} parent=47 // pred_fallthru
          _
      $region48: #{tpu_custom_call.1} parent=5 // pred_fallthru
        _
    $region6: #{tpu_custom_call.1} parent=1 // loop_footer
      %s20 = sadd.s32 1, %s16
    $region7: #{tpu_custom_call.1} parent=1 // loop_footer_branch
      %15 = sbr.rel target = $region3
    $region8: #{tpu_custom_call.1} parent=1 // loop_exit
      _
    %897 = vsyncpa [#allocation3], 1
    %s898 = scalar_lea.sflag [#allocation3], 1
    %899 = vsyncpa %s898, 1
    %900 = vsyncpa [#allocation4], 1
    %s901 = scalar_lea.sflag [#allocation4], 1
    %902 = vsyncpa %s901, 1

</llo_original>
